<compile_context>
chip_gen: v5e
topology: v5e:2x2
jax: 0.10.0
libtpu: 0.0.40
codegen_flags: <defaults>
</compile_context>

<pallas_src>
import functools
import math

import jax
import jax.numpy as jnp
from jax import lax
from jax.experimental import pallas as pl
from jax.experimental.pallas import tpu as pltpu


def _round_up(a: int, b: int) -> int:
    return ((a + b - 1) // b) * b


def _rbf_kernel(x_ref, o_ref, *, bins: int, bins_pad: int, vmin: float,
                step: float, sqrt_gamma: float, chunk: int):
    # x_ref: (1, blk) f32, N on the lane axis.   o_ref: (blk, bins) out_dtype.
    blk = x_ref.shape[1]
    n_chunks = blk // chunk

    # Centers generated in-kernel (no DMA, no extra double buffer), pre-scaled
    # by sqrt(gamma) so the hot path is just diff -> square -> exp.
    # bins_pad rounds the sublane dim up to a multiple of 8 (safe shapes for
    # the XLU transpose); extra rows are finite garbage and sliced off.
    row = lax.broadcasted_iota(jnp.int32, (bins_pad, 1), 0).astype(jnp.float32)
    cs = (jnp.float32(vmin) + row * jnp.float32(step)) * jnp.float32(sqrt_gamma)

    def body(c, carry):
        off = pl.multiple_of(c * chunk, chunk)
        xs = x_ref[:, pl.ds(off, chunk)] * jnp.float32(sqrt_gamma)   # (1, chunk)
        d = cs - xs                                 # (bins_pad, chunk), lane-dense
        s = jnp.exp(-(d * d))                       # EUP slot
        t = jnp.transpose(s, (1, 0))                # XLU relayout -> (chunk, bins_pad)
        o_ref[pl.ds(off, chunk), :] = t[:, :bins].astype(o_ref.dtype)
        return carry

    lax.fori_loop(0, n_chunks, body, 0, unroll=True)


def rbf_expansion(x, vmin: float = 0.0, vmax: float = 8.0, bins: int = 40,
                  lengthscale=None, block_n: int = 8192,
                  out_dtype=jnp.float32):
    """Pallas TPU implementation of RBFExpansion.forward: x (N,) -> (N, bins)."""
    # Buffer / parameter setup, mirroring nn.Module.__init__.
    step = float(vmax - vmin) / float(bins - 1)     # == mean(diff(linspace))
    if lengthscale is None:
        # NOTE: mirrors the PyTorch module's quirk: gamma = 1 / lengthscale
        # (not 1 / lengthscale**2) in this branch.
        gamma = 1.0 / step
    else:
        gamma = 1.0 / float(lengthscale) ** 2
    sqrt_gamma = math.sqrt(gamma)

    x = x.astype(jnp.float32)
    n = x.shape[0]

    # Block over N.  VMEM use ~ 2 * blk * 512 B for the (lane-padded) output
    # double buffer, so blk=16384 tops out around ~17 MiB -- inside the 32 MiB
    # scoped-VMEM limit requested below on every generation (v5e default is
    # only 16 MiB, hence the explicit limit).
    n128 = _round_up(max(n, 1), 128)
    blk = max(128, (int(block_n) // 128) * 128)
    blk = min(blk, 16384, n128)
    if blk >= n128 and n128 >= 256:
        # Would otherwise be a single grid step: split it so the "parallel"
        # grid axis can be sharded across both TensorCores on v7x.
        blk = _round_up(n128 // 2, 128)
    padded_n = _round_up(n, blk)
    if padded_n != n:
        # Padded tail computes finite values that are sliced off below.
        x = jnp.pad(x, (0, padded_n - n))
    x2 = x.reshape(1, padded_n)                     # N on the lane axis

    bins_pad = _round_up(bins, 8)                   # 8-aligned sublanes for the transpose
    chunk = next(c for c in (512, 256, 128) if blk % c == 0)
    grid = (padded_n // blk,)

    out = pl.pallas_call(
        functools.partial(_rbf_kernel, bins=bins, bins_pad=bins_pad,
                          vmin=float(vmin), step=step,
                          sqrt_gamma=sqrt_gamma, chunk=chunk),
        out_shape=jax.ShapeDtypeStruct((padded_n, bins), out_dtype),
        grid=grid,
        in_specs=[pl.BlockSpec((1, blk), lambda i: (0, i))],
        out_specs=pl.BlockSpec((blk, bins), lambda i: (i, 0)),
        compiler_params=pltpu.CompilerParams(
            dimension_semantics=("parallel",),
            vmem_limit_bytes=32 * 1024 * 1024),
    )(x2)

    return out[:n]


def _reference(x, vmin=0.0, vmax=8.0, bins=40):
    centers = jnp.linspace(vmin, vmax, bins, dtype=jnp.float32)
    gamma = 1.0 / (float(vmax - vmin) / float(bins - 1))
    return jnp.exp(-gamma * (x[:, None] - centers[None, :]) ** 2)


if __name__ == "__main__":
    key = jax.random.PRNGKey(0)

    # (n, block_n): covers the single-block v7x split path (200 -> 2 steps of
    # 128), multi-step grids with padded tails, and both inner chunk sizes.
    cases = [(200, 8192), (1000, 256), (3000, 1024)]
    for n, blk in cases:
        key, sub = jax.random.split(key)
        x = jax.random.uniform(sub, (n,), dtype=jnp.float32, minval=0.0, maxval=8.0)
        out = jax.block_until_ready(rbf_expansion(x, block_n=blk))
        ref = _reference(x)
        assert out.shape == (n, 40), out.shape
        assert jnp.allclose(out, ref, atol=2e-5, rtol=1e-4), f"mismatch (n={n})"

    # bf16 output path (cast fused into the store; halves output bytes).
    key, sub = jax.random.split(key)
    xb = jax.random.uniform(sub, (1000,), dtype=jnp.float32, minval=0.0, maxval=8.0)
    out16 = jax.block_until_ready(
        rbf_expansion(xb, block_n=512, out_dtype=jnp.bfloat16))
    assert out16.dtype == jnp.bfloat16 and out16.shape == (1000, 40)
    assert jnp.allclose(out16.astype(jnp.float32), _reference(xb),
                        atol=5e-3, rtol=2e-2), "bf16 mismatch"

    print("KERNEL_OK")
</pallas_src>

<mosaic_0001>
module attributes {stable_mosaic.version = 11 : i64} {
  func.func @_rbf_kernel(%arg0: i32, %arg1: memref<1x128xf32, #tpu.memory_space<vmem>>, %arg2: memref<128x40xf32, #tpu.memory_space<vmem>>) attributes {dimension_semantics = [#tpu.dimension_semantics<parallel>], iteration_bounds = array<i64: 2>, scalar_prefetch = 0 : i64, scratch_operands = 0 : i64, tpu.core_type = #tpu.core_type<tc>, window_params = [{transform_indices = @transform_0, window_bounds = array<i64: 1, 128>}, {transform_indices = @transform_1, window_bounds = array<i64: 128, 40>}]} {
    %0 = tpu.iota {dimensions = array<i32: 0>} : vector<40x1xi32>
    %1 = arith.sitofp %0 : vector<40x1xi32> to vector<40x1xf32>
    %cst = arith.constant 0.205128208 : f32
    %2 = vector.broadcast %cst : f32 to vector<40x1xf32>
    %3 = arith.mulf %1, %2 : vector<40x1xf32>
    %cst_0 = arith.constant 0.000000e+00 : f32
    %4 = vector.broadcast %cst_0 : f32 to vector<40x1xf32>
    %5 = arith.addf %4, %3 : vector<40x1xf32>
    %cst_1 = arith.constant 2.207940e+00 : f32
    %6 = vector.broadcast %cst_1 : f32 to vector<40x1xf32>
    %7 = arith.mulf %5, %6 : vector<40x1xf32>
    %c0_i32 = arith.constant 0 : i32
    %c128_i32 = arith.constant 128 : i32
    %8 = arith.muli %c0_i32, %c128_i32 : i32
    %9 = tpu.assume_multiple %8, 128 : i32
    %c0 = arith.constant 0 : index
    %10 = arith.index_cast %9 : i32 to index
    %11 = vector.load %arg1[%c0, %10] : memref<1x128xf32, #tpu.memory_space<vmem>>, vector<1x128xf32>
    %cst_2 = arith.constant 2.207940e+00 : f32
    %12 = vector.broadcast %cst_2 : f32 to vector<1x128xf32>
    %13 = arith.mulf %11, %12 : vector<1x128xf32>
    %14 = vector.broadcast %7 : vector<40x1xf32> to vector<40x128xf32>
    %15 = vector.broadcast %13 : vector<1x128xf32> to vector<40x128xf32>
    %16 = arith.subf %14, %15 : vector<40x128xf32>
    %17 = arith.mulf %16, %16 : vector<40x128xf32>
    %cst_3 = arith.constant 0.000000e+00 : f32
    %18 = vector.broadcast %cst_3 : f32 to vector<40x128xf32>
    %19 = arith.subf %18, %17 : vector<40x128xf32>
    %20 = math.exp %19 : vector<40x128xf32>
    %21 = tpu.transpose %20, [1, 0] : vector<40x128xf32> -> vector<128x40xf32>
    %22 = arith.index_cast %9 : i32 to index
    %c0_4 = arith.constant 0 : index
    %23 = vector.load %arg2[%22, %c0_4] : memref<128x40xf32, #tpu.memory_space<vmem>>, vector<128x40xf32>
    tpu.vector_store %arg2[%22, %c0_4], %21 {strides = array<i32>} : memref<128x40xf32, #tpu.memory_space<vmem>>, vector<128x40xf32>,
    %c1_i32 = arith.constant 1 : i32
    return
  }
  func.func @transform_0(%arg0: i32) -> (i32, i32) {
    %c0_i32 = arith.constant 0 : i32
    %c0_i32_0 = arith.constant 0 : i32
    return %c0_i32, %arg0 : i32, i32
  }
  func.func @transform_1(%arg0: i32) -> (i32, i32) {
    %c0_i32 = arith.constant 0 : i32
    %c0_i32_0 = arith.constant 0 : i32
    return %arg0, %c0_i32 : i32, i32
  }
}

</mosaic_0001>

<llo_original>
// kernel: tpu_custom_call.1
$region0: #{tpu_custom_call.1}
  #allocation0 [shape = 'u32[]', space=smem, size = 0x4, offset = 0x4, fixed_abs, tag = 'smem constant byte address 0x4 - core index']
  #allocation1 [shape = 'u32[72,128]{1,0:T(1,128)}', space=vmem, size = 0x9000, scoped, tag = 'internal scratch']
  %s0 = inlined_call_operand.hbm [shape: f32[1,256], index: 0, kind: input, shape index: {}]
  %s1 = inlined_call_operand.vmem [shape: f32[256,40], index: 1, kind: output, shape index: {}]
  %s2 = sld [smem:[#allocation0]]
  $region41: #{tpu_custom_call.1} parent=0
    _
  %s4 = ssub.s32 1, %s2
  %s5 = scalar_select 0, %s4, %s2
  $region1: #{tpu_custom_call.1} parent=0
    #allocation2 [shape = 'u8[1024]{0}', space=vmem, size = 0x400, scoped, tag = 'input window, operand 0']
    #allocation3 [shape = 's32[2]{0}', space=sflag, size = 0x8, scoped, tag = 'scoped memory for tpu_custom_call.1']
    %6 = vsyncpa [#allocation3], 0
    %s7 = scalar_lea.sflag [#allocation3], 1
    %8 = vsyncpa %s7, 0
    loop: start=0, step=1, limit=4
    $region2: #{tpu_custom_call.1} parent=1 // loop_pre_header
      _
    $region3: #{tpu_custom_call.1} parent=1 // loop_header
      %s10 = sphi 0, %s14
      %p11 = scmp.ge.s32.totalorder %s10, 4
      %s20 = sphi 0, %s22
      %s23 = sphi 0, %s20
      %s24 = sphi 0, %s23
      %s40 = sphi 0, %s24
      %s46 = sphi 0, %s48
      %s49 = sphi 0, %s46
      %s50 = sphi 0, %s49
      %s66 = sphi 0, %s50
    $region4: #{tpu_custom_call.1} parent=1 // loop_header_branch
      %13 = sbr.rel (%p11) target = $region8
    $region5: #{tpu_custom_call.1} parent=1 // loop_body
      %s15 = ssub.s32 %s10, 1
      %s16 = ssub.s32 %s10, 2
      %s17 = sadd.s32 %s10, 1
      %s18 = ssub.s32 %s10, %s17
      %p19 = scmp.eq.s32.totalorder %s18, 0
      %s21 = sadd.s32 %s20, 1
      %s22 = scalar_select %p19, %s20, %s21
      %p25 = pneg %p19
      %p26 = scmp.eq.s32.totalorder %s10, 1
      %p27 = por %p25, %p26
      %p28 = scmp.ne.s32.totalorder %s20, %s23
      %p29 = scmp.eq.s32.totalorder %s10, 0
      %p30 = por %p28, %p29
      %p31 = scmp.ne.s32.totalorder %s20, %s23
      %p32 = scmp.eq.s32.totalorder %s15, 1
      %p33 = por %p31, %p32
      %p34 = scmp.ne.s32.totalorder %s23, %s24
      %p35 = scmp.eq.s32.totalorder %s15, 0
      %p36 = por %p34, %p35
      %p37 = scmp.ne.s32.totalorder %s23, %s24
      %p38 = scmp.eq.s32.totalorder %s16, 1
      %p39 = por %p37, %p38
      %p41 = scmp.ne.s32.totalorder %s24, %s40
      %p42 = scmp.eq.s32.totalorder %s16, 0
      %p43 = por %p41, %p42
      %s44 = ssub.s32 %s10, %s17
      %p45 = scmp.eq.s32.totalorder %s44, 0
      %s47 = sadd.s32 %s46, 1
      %s48 = scalar_select %p45, %s46, %s47
      %p51 = pneg %p45
      %p52 = scmp.eq.s32.totalorder %s10, 1
      %p53 = por %p51, %p52
      %p54 = scmp.ne.s32.totalorder %s46, %s49
      %p55 = scmp.eq.s32.totalorder %s10, 0
      %p56 = por %p54, %p55
      %p57 = scmp.ne.s32.totalorder %s46, %s49
      %p58 = scmp.eq.s32.totalorder %s15, 1
      %p59 = por %p57, %p58
      %p60 = scmp.ne.s32.totalorder %s49, %s50
      %p61 = scmp.eq.s32.totalorder %s15, 0
      %p62 = por %p60, %p61
      %p63 = scmp.ne.s32.totalorder %s49, %s50
      %p64 = scmp.eq.s32.totalorder %s16, 1
      %p65 = por %p63, %p64
      %p67 = scmp.ne.s32.totalorder %s50, %s66
      %p68 = scmp.eq.s32.totalorder %s16, 0
      %p69 = por %p67, %p68
      %p70 = scmp.le.s32.totalorder 1, %s10
      %p71 = scmp.lt.s32.totalorder %s10, 3
      %p72 = pnand %p70, %p71
      %p73 = pneg %p72
      // Predicated region
      $region9: #{tpu_custom_call.1} parent=5 // pred_check
        _
      $region10: #{tpu_custom_call.1} parent=5 // pred_check_branch
        %75 = sbr.rel (%p72) target = $region12
      $region11: #{tpu_custom_call.1} parent=5 // pred_region
        %s76 = ssub.s32 %s10, 1
      $region12: #{tpu_custom_call.1} parent=5 // pred_fallthru
        _
      %p77 = scmp.lt.s32.totalorder %s10, 2
      // Predicated region
      $region13: #{tpu_custom_call.1} parent=5 // pred_check
        %p78 = pneg %p77
      $region14: #{tpu_custom_call.1} parent=5 // pred_check_branch
        %80 = sbr.rel (%p78) target = $region16
      $region15: #{tpu_custom_call.1} parent=5 // pred_region
        // Predicated region
        $region17: #{tpu_custom_call.1} parent=15 // pred_check
          %p81 = pneg %p30
        $region18: #{tpu_custom_call.1} parent=15 // pred_check_branch
          %83 = sbr.rel (%p81) target = $region20
        $region19: #{tpu_custom_call.1} parent=15 // pred_region
          %s84 = sand.u32 %s20, 1
          %s85 = scalar_lea.sflag [#allocation3], %s84
          %s86 = sand.u32 %s20, 1
          %s87 = scalar_lea.vmem [#allocation2], %s86
          %89 = vsyncadd %s85, 0
          %s90 = scalar_lea.hbm %s0, %s10
          %s92 = sshll.u32 %s90, 4
          %s93 = int_to_ptr.hbm [resolvable:$true] %s92
          %s94 = sshll.u32 %s87, 4
          %s95 = int_to_ptr.vmem [resolvable:$true] %s94
          %97 = dma.hbm_to_vmem [thread:$0]  %s93, 16, %s95, %s85
        $region20: #{tpu_custom_call.1} parent=15 // pred_fallthru
          _
      $region16: #{tpu_custom_call.1} parent=5 // pred_fallthru
        _
      %p98 = scmp.le.s32.totalorder 1, %s10
      %p99 = scmp.lt.s32.totalorder %s10, 3
      %p100 = pnand %p98, %p99
      %p101 = pneg %p100
      // Predicated region
      $region21: #{tpu_custom_call.1} parent=5 // pred_check
        _
      $region22: #{tpu_custom_call.1} parent=5 // pred_check_branch
        %103 = sbr.rel (%p100) target = $region24
      $region23: #{tpu_custom_call.1} parent=5 // pred_region
        %s104 = ssub.s32 %s10, 1
        %s105 = sand.u32 %s23, 1
        %s106 = scalar_lea.sflag [#allocation3], %s105
        %s107 = sand.u32 %s23, 1
        %s108 = scalar_lea.vmem [#allocation2], %s107
        // Predicated region
        $region25: #{tpu_custom_call.1} parent=23 // pred_check
          %p109 = pneg %p36
        $region26: #{tpu_custom_call.1} parent=23 // pred_check_branch
          %111 = sbr.rel (%p109) target = $region28
        $region27: #{tpu_custom_call.1} parent=23 // pred_region
          %113 = dma.done %s106, 16
        $region28: #{tpu_custom_call.1} parent=23 // pred_fallthru
          _
        %s114 = sand.u32 %s23, 1
        %s115 = scalar_lea.sflag [#allocation3], %s114
        %s116 = sand.u32 %s23, 1
        %s117 = scalar_lea.vmem [#allocation2], %s116
        %p118 = pneg %p36
        %p119 = pneg %p33
        %p120 = pneg %p62
        %p121 = pneg %p59
        %s122 = smul.u32 16, %s15
        %p123 = scmp.lt.s32.totalorder %s122, 31
        %s124 = scalar_select %p123, %s122, 31
        %s125 = smul.addr %s124, 8
        %s126 = scalar_lea.vmem %s1, %s125
        %s127 = smul.u32 16, %s15
        %p128 = scmp.lt.s32.totalorder %s127, 31
        %s129 = scalar_select %p128, %s127, 31
        %s130 = smul.addr %s129, 8
        %s131 = scalar_lea.vmem %s1, %s130
        %s132 = smul.u32 16, %s15
        %v133 = vlaneseq
        %v134 = vshrl.u32 %v133, 7
        %v135 = vadd.s32 %v134, 8
        %v136 = vadd.s32 %v134, 16
        %v137 = vadd.s32 %v134, 24
        %v138 = vadd.s32 %v134, 32
        %v139 = vcvt.s32.f32 %v134
        %v140 = vcvt.s32.f32 %v135
        %v141 = vcvt.s32.f32 %v136
        %v142 = vcvt.s32.f32 %v137
        %v143 = vcvt.s32.f32 %v138
        %v144 = vmul.f32 %v139, 0.20512821
        %v145 = vmul.f32 %v140, 0.20512821
        %v146 = vmul.f32 %v141, 0.20512821
        %v147 = vmul.f32 %v142, 0.20512821
        %v148 = vmul.f32 %v143, 0.20512821
        %v149 = vadd.f32 %v144, 0.0
        %v150 = vadd.f32 %v145, 0.0
        %v151 = vadd.f32 %v146, 0.0
        %v152 = vadd.f32 %v147, 0.0
        %v153 = vadd.f32 %v148, 0.0
        %v154 = vmul.f32 %v149, 2.20794
        %v155 = vmul.f32 %v150, 2.20794
        %v156 = vmul.f32 %v151, 2.20794
        %v157 = vmul.f32 %v152, 2.20794
        %v158 = vmul.f32 %v153, 2.20794
        %v159 = vld [vmem:[%s108] sm:$0x1]
        %v160 = vmul.f32 %v159, 2.20794
        %v162 = vperm.slane %v160, 0
        %v164 = vsub.f32 %v154, %v162
        %v165 = vsub.f32 %v155, %v162
        %v166 = vsub.f32 %v156, %v162
        %v167 = vsub.f32 %v157, %v162
        %v168 = vsub.f32 %v158, %v162
        %v169 = vmul.f32 %v164, %v164
        %v170 = vmul.f32 %v165, %v165
        %v171 = vmul.f32 %v166, %v166
        %v172 = vmul.f32 %v167, %v167
        %v173 = vmul.f32 %v168, %v168
        %v174 = vsub.f32 0.0, %v169
        %v175 = vsub.f32 0.0, %v170
        %v176 = vsub.f32 0.0, %v171
        %v177 = vsub.f32 0.0, %v172
        %v178 = vsub.f32 0.0, %v173
        %v179 = vmul.f32 %v174, 1.442695
        %v180 = vpow.pop %v179
        %v181 = vmul.f32 %v175, 1.442695
        %v182 = vpow.pop %v181
        %v183 = vmul.f32 %v176, 1.442695
        %v184 = vpow.pop %v183
        %v185 = vmul.f32 %v177, 1.442695
        %v186 = vpow.pop %v185
        %v187 = vmul.f32 %v178, 1.442695
        %v188 = vpow.pop %v187
        %189 = vxpose.xlu0.b32.start [1/16] %v180, 128
        %190 = vxpose.xlu0.b32.cont [2/16] %v182, 128
        %191 = vxpose.xlu0.b32.cont [3/16] %v184, 128
        %192 = vxpose.xlu0.b32.cont [4/16] %v186, 128
        %193 = vxpose.xlu0.b32.cont [5/16] %v188, 128
        %194 = vxpose.xlu0.b32.cont [6/16] 0.0, 128
        %195 = vxpose.xlu0.b32.cont [7/16] 0.0, 128
        %196 = vxpose.xlu0.b32.cont [8/16] 0.0, 128
        %197 = vxpose.xlu0.b32.cont [9/16] 0.0, 128
        %198 = vxpose.xlu0.b32.cont [10/16] 0.0, 128
        %199 = vxpose.xlu0.b32.cont [11/16] 0.0, 128
        %200 = vxpose.xlu0.b32.cont [12/16] 0.0, 128
        %201 = vxpose.xlu0.b32.cont [13/16] 0.0, 128
        %202 = vxpose.xlu0.b32.cont [14/16] 0.0, 128
        %203 = vxpose.xlu0.b32.cont [15/16] 0.0, 128
        %204 = vxpose.xlu0.b32.end [16/16] 0.0, 128
        %v205 = vpop.trf.xlu0
        %v206 = vpop.trf.xlu0
        %v207 = vpop.trf.xlu0
        %v208 = vpop.trf.xlu0
        %v209 = vpop.trf.xlu0
        %v210 = vpop.trf.xlu0
        %v211 = vpop.trf.xlu0
        %v212 = vpop.trf.xlu0
        %v213 = vpop.trf.xlu0
        %v214 = vpop.trf.xlu0
        %v215 = vpop.trf.xlu0
        %v216 = vpop.trf.xlu0
        %v217 = vpop.trf.xlu0
        %v218 = vpop.trf.xlu0
        %v219 = vpop.trf.xlu0
        %v220 = vpop.trf.xlu0
        %vm221 = vcmask 326656
        %222 = vst.msk [vmem:[%s131] sm:$0xff] %vm221, %v205
        %223 = vst.msk [vmem:[%s131 + $0x8] sm:$0xff] %vm221, %v206
        %224 = vst.msk [vmem:[%s131 + $0x10] sm:$0xff] %vm221, %v207
        %225 = vst.msk [vmem:[%s131 + $0x18] sm:$0xff] %vm221, %v208
        %226 = vst.msk [vmem:[%s131 + $0x20] sm:$0xff] %vm221, %v209
        %227 = vst.msk [vmem:[%s131 + $0x28] sm:$0xff] %vm221, %v210
        %228 = vst.msk [vmem:[%s131 + $0x30] sm:$0xff] %vm221, %v211
        %229 = vst.msk [vmem:[%s131 + $0x38] sm:$0xff] %vm221, %v212
        %230 = vst.msk [vmem:[%s131 + $0x40] sm:$0xff] %vm221, %v213
        %231 = vst.msk [vmem:[%s131 + $0x48] sm:$0xff] %vm221, %v214
        %232 = vst.msk [vmem:[%s131 + $0x50] sm:$0xff] %vm221, %v215
        %233 = vst.msk [vmem:[%s131 + $0x58] sm:$0xff] %vm221, %v216
        %234 = vst.msk [vmem:[%s131 + $0x60] sm:$0xff] %vm221, %v217
        %235 = vst.msk [vmem:[%s131 + $0x68] sm:$0xff] %vm221, %v218
        %236 = vst.msk [vmem:[%s131 + $0x70] sm:$0xff] %vm221, %v219
        %237 = vst.msk [vmem:[%s131 + $0x78] sm:$0xff] %vm221, %v220
        %s238 = smul.u32 16, %s15
        %p239 = scmp.lt.s32.totalorder %s238, 31
        %s240 = scalar_select %p239, %s238, 31
        %s241 = smul.addr %s240, 8
        %s242 = scalar_lea.vmem %s1, %s241
        // Predicated region
        $region29: #{tpu_custom_call.1} parent=23 // pred_check
          %p243 = pneg %p59
        $region30: #{tpu_custom_call.1} parent=23 // pred_check_branch
          %245 = sbr.rel (%p243) target = $region32
        $region31: #{tpu_custom_call.1} parent=23 // pred_region
          %s246 = smul.u32 16, %s15
        $region32: #{tpu_custom_call.1} parent=23 // pred_fallthru
          _
      $region24: #{tpu_custom_call.1} parent=5 // pred_fallthru
        _
      %p247 = scmp.le.s32.totalorder 2, %s10
      // Predicated region
      $region33: #{tpu_custom_call.1} parent=5 // pred_check
        %p248 = pneg %p247
      $region34: #{tpu_custom_call.1} parent=5 // pred_check_branch
        %250 = sbr.rel (%p248) target = $region36
      $region35: #{tpu_custom_call.1} parent=5 // pred_region
        %s251 = ssub.s32 %s10, 2
        // Predicated region
        $region37: #{tpu_custom_call.1} parent=35 // pred_check
          %p252 = pneg %p65
        $region38: #{tpu_custom_call.1} parent=35 // pred_check_branch
          %254 = sbr.rel (%p252) target = $region40
        $region39: #{tpu_custom_call.1} parent=35 // pred_region
          %s255 = smul.u32 16, %s16
          %p256 = scmp.lt.s32.totalorder %s255, 31
          %s257 = scalar_select %p256, %s255, 31
          %s258 = smul.addr %s257, 8
          %s259 = scalar_lea.vmem %s1, %s258
        $region40: #{tpu_custom_call.1} parent=35 // pred_fallthru
          _
      $region36: #{tpu_custom_call.1} parent=5 // pred_fallthru
        _
    $region6: #{tpu_custom_call.1} parent=1 // loop_footer
      %s14 = sadd.s32 1, %s10
    $region7: #{tpu_custom_call.1} parent=1 // loop_footer_branch
      %9 = sbr.rel target = $region3
    $region8: #{tpu_custom_call.1} parent=1 // loop_exit
      _
    %260 = vsyncpa [#allocation3], 1
    %s261 = scalar_lea.sflag [#allocation3], 1
    %262 = vsyncpa %s261, 1

</llo_original>
